<compile_context>
chip_gen: v5e
topology: v5e:2x2
jax: 0.10.0
libtpu: 0.0.40
codegen_flags: <defaults>
</compile_context>

<pallas_src>
import functools

import jax
import jax.numpy as jnp
from jax.experimental import pallas as pl
from jax.experimental.pallas import tpu as pltpu


# ----------------------------- Pallas kernel ------------------------------- #

def fused_embed_kernel(xf_ref, mask_ref, wc_ref, bc_ref, wlt_ref, bl_ref,
                       o_ref, *, height, width):
    """Fused conv3x3(+bias, ReLU) -> global-avg-pool -> linear, one image/step.

    xf_ref  : (1, C, Lf)   zero-padded, flattened image for this batch element,
                           Lf = (H+2)*(W+2) + 2*(W+3)  (extra halo of zeros).
    mask_ref: (1, HWp)     1.0 at valid (non padding-ring) pixels, else 0.0.
    wc_ref  : (9, Cout, C) conv taps, wc[ki*3+kj, co, ci] = W[co, ci, ki, kj].
    bc_ref  : (Cout, 1)    conv bias (column).
    wlt_ref : (E, Cout)    linear weight, transposed.
    bl_ref  : (E, 1)       linear bias (column).
    o_ref   : (1, E, 1)    embedding column for this batch element.
    """
    wpad = width + 2
    hwp = (height + 2) * wpad

    xf = xf_ref[0]                                    # [C, Lf], lane-dense
    c_out = wc_ref.shape[1]

    # Conv as 9 shifted lane-slices, each a small MXU matmul accumulated in f32.
    # Output pixel (h, w) lives at padded-flat position q = (h+1)*wpad + (w+1);
    # tap (ki, kj) reads padded-flat position q + (ki-1)*wpad + (kj-1), i.e.
    # the slice of xf starting at ki*wpad + kj (the left halo of W+3 zeros in
    # xf absorbs the negative offsets, so every slice is statically in-bounds).
    acc = jnp.zeros((c_out, hwp), jnp.float32)
    for ki in range(3):
        for kj in range(3):
            start = ki * wpad + kj
            acc = acc + jnp.dot(wc_ref[ki * 3 + kj],
                                xf[:, start:start + hwp],
                                preferred_element_type=jnp.float32)

    acc = jnp.maximum(acc + bc_ref[...], 0.0)         # conv bias + ReLU
    acc = acc * mask_ref[...]                         # zero the padding ring

    # Global average pool: lane reduction over the spatial axis.
    pooled = jnp.sum(acc, axis=1, keepdims=True) * (1.0 / (height * width))

    # Linear projection to the embedding (column form -> no transposes needed).
    emb = jnp.dot(wlt_ref[...], pooled,
                  preferred_element_type=jnp.float32) + bl_ref[...]
    o_ref[0] = emb                                    # [E, 1]


# ------------------------------- glue / wrapper ----------------------------- #

def init_params(key, c_in=4, c_out=8, emb=32):
    """Deterministic stand-in for the (undefined) pretrained feature extractor."""
    k1, k2, k3, k4 = jax.random.split(key, 4)
    w_conv = jax.random.normal(k1, (c_out, c_in, 3, 3), jnp.float32) * 0.05  # OIHW
    b_conv = jax.random.normal(k2, (c_out,), jnp.float32) * 0.05
    w_lin = jax.random.normal(k3, (c_out, emb), jnp.float32) * 0.1
    b_lin = jax.random.normal(k4, (emb,), jnp.float32) * 0.1
    return {"w_conv": w_conv, "b_conv": b_conv, "w_lin": w_lin, "b_lin": b_lin}


@jax.jit
def my_model_forward(x1_nchw, x2_nchw, params):
    """Matches MyModel.forward(x1, x2) semantics: embeds x1, ignores x2."""
    del x2_nchw  # unused, as in the original forward
    x = x1_nchw.astype(jnp.float32)
    batch, c_in, height, width = x.shape
    c_out, emb_dim = params["w_lin"].shape
    wpad, hpad = width + 2, height + 2
    hwp = hpad * wpad
    lf = hwp + 2 * (width + 3)          # flat length incl. left/right halo

    # Zero-pad spatially, flatten HxW, add a (W+3)-zero halo at both ends so
    # every conv tap is a static, in-bounds lane slice inside the kernel.
    # (~1.4x HBM bytes for the hot operand instead of the 9x im2col blow-up.)
    xpad = jnp.pad(x, ((0, 0), (0, 0), (1, 1), (1, 1)))
    xf = jnp.pad(xpad.reshape(batch, c_in, hwp),
                 ((0, 0), (0, 0), (width + 3, width + 3)))

    # Valid-pixel mask over the padded-flat spatial axis (built once, resident).
    mask = jnp.pad(jnp.ones((height, width), jnp.float32),
                   ((1, 1), (1, 1))).reshape(1, hwp)

    # Kernel-friendly parameter layouts (tiny; done once under jit).
    wc_taps = jnp.transpose(params["w_conv"], (2, 3, 0, 1)).reshape(9, c_out, c_in)
    bc_col = params["b_conv"].reshape(c_out, 1)
    wl_t = params["w_lin"].T                               # [E, Cout]
    bl_col = params["b_lin"].reshape(emb_dim, 1)

    kernel = functools.partial(fused_embed_kernel, height=height, width=width)

    out = pl.pallas_call(
        kernel,
        out_shape=jax.ShapeDtypeStruct((batch, emb_dim, 1), jnp.float32),
        grid_spec=pltpu.PrefetchScalarGridSpec(
            num_scalar_prefetch=0,
            grid=(batch,),
            in_specs=[
                pl.BlockSpec((1, c_in, lf), lambda b: (b, 0, 0)),
                # Constant index_maps -> mask/weights/biases stay VMEM-resident
                # across grid steps (no per-step re-DMA).
                pl.BlockSpec((1, hwp), lambda b: (0, 0)),
                pl.BlockSpec((9, c_out, c_in), lambda b: (0, 0, 0)),
                pl.BlockSpec((c_out, 1), lambda b: (0, 0)),
                pl.BlockSpec((emb_dim, c_out), lambda b: (0, 0)),
                pl.BlockSpec((emb_dim, 1), lambda b: (0, 0)),
            ],
            out_specs=pl.BlockSpec((1, emb_dim, 1), lambda b: (b, 0, 0)),
        ),
        compiler_params=pltpu.CompilerParams(
            dimension_semantics=("parallel",)),   # batch steps are independent
    )(xf, mask, wc_taps, bc_col, wl_t, bl_col)

    return out[:, :, 0]                                    # [B, E]


# ------------------------- pure-JAX reference (exact f32) ------------------- #

def reference_forward(x1, params):
    x = x1.astype(jnp.float32)
    b, c, h, w = x.shape
    w_conv, b_conv = params["w_conv"], params["b_conv"]
    w_lin, b_lin = params["w_lin"], params["b_lin"]
    xp = jnp.pad(x, ((0, 0), (0, 0), (1, 1), (1, 1)))
    y = jnp.zeros((b, w_conv.shape[0], h, w), jnp.float32)
    for ki in range(3):
        for kj in range(3):
            patch = xp[:, None, :, ki:ki + h, kj:kj + w]        # [B,1,C,H,W]
            tap = w_conv[None, :, :, ki, kj, None, None]        # [1,Cout,C,1,1]
            y = y + (patch * tap).sum(axis=2)
    y = jnp.maximum(y + b_conv[None, :, None, None], 0.0)
    pooled = jnp.mean(y, axis=(2, 3))                           # [B, Cout]
    return (pooled[:, :, None] * w_lin[None, :, :]).sum(axis=1) + b_lin[None, :]


# ----------------------------------- main ----------------------------------- #

if __name__ == "__main__":
    key = jax.random.PRNGKey(0)
    kx1, kx2, kp = jax.random.split(key, 3)

    B, C, H, W = 2, 4, 16, 16
    x1 = jax.random.normal(kx1, (B, C, H, W), jnp.float32)
    x2 = jax.random.normal(kx2, (B, C, H, W), jnp.float32)   # unused by forward
    params = init_params(kp, c_in=C, c_out=8, emb=32)

    out = my_model_forward(x1, x2, params)
    jax.block_until_ready(out)
    assert out.shape == (B, 32) and out.dtype == jnp.float32

    ref = reference_forward(x1, params)
    # Loose tolerance to stay robust to MXU f32-via-bf16-pass precision modes.
    assert bool(jnp.allclose(out, ref, rtol=5e-3, atol=5e-3)), (
        float(jnp.max(jnp.abs(out - ref))))
    print("KERNEL_OK")
</pallas_src>

<mosaic_0001>
module attributes {stable_mosaic.version = 11 : i64} {
  func.func @fused_embed_kernel(%arg0: i32, %arg1: memref<1x4x362xf32, #tpu.memory_space<vmem>>, %arg2: memref<1x324xf32, #tpu.memory_space<vmem>>, %arg3: memref<9x8x4xf32, #tpu.memory_space<vmem>>, %arg4: memref<8x1xf32, #tpu.memory_space<vmem>>, %arg5: memref<32x8xf32, #tpu.memory_space<vmem>>, %arg6: memref<32x1xf32, #tpu.memory_space<vmem>>, %arg7: memref<1x32x1xf32, #tpu.memory_space<vmem>>) attributes {dimension_semantics = [#tpu.dimension_semantics<parallel>], iteration_bounds = array<i64: 2>, scalar_prefetch = 0 : i64, scratch_operands = 0 : i64, tpu.core_type = #tpu.core_type<tc>, window_params = [{transform_indices = @transform_0, window_bounds = array<i64: 1, 4, 362>}, {pipeline_mode = #tpu.pipeline_mode<synchronous>, transform_indices = @transform_1, window_bounds = array<i64: 1, 324>}, {pipeline_mode = #tpu.pipeline_mode<synchronous>, transform_indices = @transform_2, window_bounds = array<i64: 9, 8, 4>}, {pipeline_mode = #tpu.pipeline_mode<synchronous>, transform_indices = @transform_3, window_bounds = array<i64: 8, 1>}, {pipeline_mode = #tpu.pipeline_mode<synchronous>, transform_indices = @transform_4, window_bounds = array<i64: 32, 8>}, {pipeline_mode = #tpu.pipeline_mode<synchronous>, transform_indices = @transform_5, window_bounds = array<i64: 32, 1>}, {transform_indices = @transform_6, window_bounds = array<i64: 1, 32, 1>}]} {
    %c0 = arith.constant 0 : index
    %c0_0 = arith.constant 0 : index
    %c0_1 = arith.constant 0 : index
    %0 = vector.load %arg1[%c0, %c0_0, %c0_1] : memref<1x4x362xf32, #tpu.memory_space<vmem>>, vector<1x4x362xf32>
    %1 = vector.shape_cast %0 : vector<1x4x362xf32> to vector<4x362xf32>
    %cst = arith.constant 0.000000e+00 : f32
    %2 = vector.broadcast %cst : f32 to vector<8x324xf32>
    %c0_2 = arith.constant 0 : index
    %c0_3 = arith.constant 0 : index
    %c0_4 = arith.constant 0 : index
    %3 = vector.load %arg3[%c0_2, %c0_3, %c0_4] : memref<9x8x4xf32, #tpu.memory_space<vmem>>, vector<1x8x4xf32>
    %4 = vector.shape_cast %3 : vector<1x8x4xf32> to vector<8x4xf32>
    %5 = vector.extract_strided_slice %1 {offsets = [0, 0], sizes = [4, 324], strides = [1, 1]} : vector<4x362xf32> to vector<4x324xf32>
    %cst_5 = arith.constant dense<0.000000e+00> : vector<8x324xf32>
    %6 = tpu.matmul %4, %5, %cst_5 {dimension_numbers = #tpu.dot_dimension_numbers<[1], [0], [0], [1], [0, 0, 1, 1], [], []>} : vector<8x4xf32>, vector<4x324xf32>, vector<8x324xf32> -> vector<8x324xf32>
    %7 = arith.addf %2, %6 : vector<8x324xf32>
    %c1 = arith.constant 1 : index
    %c0_6 = arith.constant 0 : index
    %c0_7 = arith.constant 0 : index
    %8 = vector.load %arg3[%c1, %c0_6, %c0_7] : memref<9x8x4xf32, #tpu.memory_space<vmem>>, vector<1x8x4xf32>
    %9 = vector.shape_cast %8 : vector<1x8x4xf32> to vector<8x4xf32>
    %10 = vector.extract_strided_slice %1 {offsets = [0, 1], sizes = [4, 324], strides = [1, 1]} : vector<4x362xf32> to vector<4x324xf32>
    %cst_8 = arith.constant dense<0.000000e+00> : vector<8x324xf32>
    %11 = tpu.matmul %9, %10, %cst_8 {dimension_numbers = #tpu.dot_dimension_numbers<[1], [0], [0], [1], [0, 0, 1, 1], [], []>} : vector<8x4xf32>, vector<4x324xf32>, vector<8x324xf32> -> vector<8x324xf32>
    %12 = arith.addf %7, %11 : vector<8x324xf32>
    %c2 = arith.constant 2 : index
    %c0_9 = arith.constant 0 : index
    %c0_10 = arith.constant 0 : index
    %13 = vector.load %arg3[%c2, %c0_9, %c0_10] : memref<9x8x4xf32, #tpu.memory_space<vmem>>, vector<1x8x4xf32>
    %14 = vector.shape_cast %13 : vector<1x8x4xf32> to vector<8x4xf32>
    %15 = vector.extract_strided_slice %1 {offsets = [0, 2], sizes = [4, 324], strides = [1, 1]} : vector<4x362xf32> to vector<4x324xf32>
    %cst_11 = arith.constant dense<0.000000e+00> : vector<8x324xf32>
    %16 = tpu.matmul %14, %15, %cst_11 {dimension_numbers = #tpu.dot_dimension_numbers<[1], [0], [0], [1], [0, 0, 1, 1], [], []>} : vector<8x4xf32>, vector<4x324xf32>, vector<8x324xf32> -> vector<8x324xf32>
    %17 = arith.addf %12, %16 : vector<8x324xf32>
    %c3 = arith.constant 3 : index
    %c0_12 = arith.constant 0 : index
    %c0_13 = arith.constant 0 : index
    %18 = vector.load %arg3[%c3, %c0_12, %c0_13] : memref<9x8x4xf32, #tpu.memory_space<vmem>>, vector<1x8x4xf32>
    %19 = vector.shape_cast %18 : vector<1x8x4xf32> to vector<8x4xf32>
    %20 = vector.extract_strided_slice %1 {offsets = [0, 18], sizes = [4, 324], strides = [1, 1]} : vector<4x362xf32> to vector<4x324xf32>
    %cst_14 = arith.constant dense<0.000000e+00> : vector<8x324xf32>
    %21 = tpu.matmul %19, %20, %cst_14 {dimension_numbers = #tpu.dot_dimension_numbers<[1], [0], [0], [1], [0, 0, 1, 1], [], []>} : vector<8x4xf32>, vector<4x324xf32>, vector<8x324xf32> -> vector<8x324xf32>
    %22 = arith.addf %17, %21 : vector<8x324xf32>
    %c4 = arith.constant 4 : index
    %c0_15 = arith.constant 0 : index
    %c0_16 = arith.constant 0 : index
    %23 = vector.load %arg3[%c4, %c0_15, %c0_16] : memref<9x8x4xf32, #tpu.memory_space<vmem>>, vector<1x8x4xf32>
    %24 = vector.shape_cast %23 : vector<1x8x4xf32> to vector<8x4xf32>
    %25 = vector.extract_strided_slice %1 {offsets = [0, 19], sizes = [4, 324], strides = [1, 1]} : vector<4x362xf32> to vector<4x324xf32>
    %cst_17 = arith.constant dense<0.000000e+00> : vector<8x324xf32>
    %26 = tpu.matmul %24, %25, %cst_17 {dimension_numbers = #tpu.dot_dimension_numbers<[1], [0], [0], [1], [0, 0, 1, 1], [], []>} : vector<8x4xf32>, vector<4x324xf32>, vector<8x324xf32> -> vector<8x324xf32>
    %27 = arith.addf %22, %26 : vector<8x324xf32>
    %c5 = arith.constant 5 : index
    %c0_18 = arith.constant 0 : index
    %c0_19 = arith.constant 0 : index
    %28 = vector.load %arg3[%c5, %c0_18, %c0_19] : memref<9x8x4xf32, #tpu.memory_space<vmem>>, vector<1x8x4xf32>
    %29 = vector.shape_cast %28 : vector<1x8x4xf32> to vector<8x4xf32>
    %30 = vector.extract_strided_slice %1 {offsets = [0, 20], sizes = [4, 324], strides = [1, 1]} : vector<4x362xf32> to vector<4x324xf32>
    %cst_20 = arith.constant dense<0.000000e+00> : vector<8x324xf32>
    %31 = tpu.matmul %29, %30, %cst_20 {dimension_numbers = #tpu.dot_dimension_numbers<[1], [0], [0], [1], [0, 0, 1, 1], [], []>} : vector<8x4xf32>, vector<4x324xf32>, vector<8x324xf32> -> vector<8x324xf32>
    %32 = arith.addf %27, %31 : vector<8x324xf32>
    %c6 = arith.constant 6 : index
    %c0_21 = arith.constant 0 : index
    %c0_22 = arith.constant 0 : index
    %33 = vector.load %arg3[%c6, %c0_21, %c0_22] : memref<9x8x4xf32, #tpu.memory_space<vmem>>, vector<1x8x4xf32>
    %34 = vector.shape_cast %33 : vector<1x8x4xf32> to vector<8x4xf32>
    %35 = vector.extract_strided_slice %1 {offsets = [0, 36], sizes = [4, 324], strides = [1, 1]} : vector<4x362xf32> to vector<4x324xf32>
    %cst_23 = arith.constant dense<0.000000e+00> : vector<8x324xf32>
    %36 = tpu.matmul %34, %35, %cst_23 {dimension_numbers = #tpu.dot_dimension_numbers<[1], [0], [0], [1], [0, 0, 1, 1], [], []>} : vector<8x4xf32>, vector<4x324xf32>, vector<8x324xf32> -> vector<8x324xf32>
    %37 = arith.addf %32, %36 : vector<8x324xf32>
    %c7 = arith.constant 7 : index
    %c0_24 = arith.constant 0 : index
    %c0_25 = arith.constant 0 : index
    %38 = vector.load %arg3[%c7, %c0_24, %c0_25] : memref<9x8x4xf32, #tpu.memory_space<vmem>>, vector<1x8x4xf32>
    %39 = vector.shape_cast %38 : vector<1x8x4xf32> to vector<8x4xf32>
    %40 = vector.extract_strided_slice %1 {offsets = [0, 37], sizes = [4, 324], strides = [1, 1]} : vector<4x362xf32> to vector<4x324xf32>
    %cst_26 = arith.constant dense<0.000000e+00> : vector<8x324xf32>
    %41 = tpu.matmul %39, %40, %cst_26 {dimension_numbers = #tpu.dot_dimension_numbers<[1], [0], [0], [1], [0, 0, 1, 1], [], []>} : vector<8x4xf32>, vector<4x324xf32>, vector<8x324xf32> -> vector<8x324xf32>
    %42 = arith.addf %37, %41 : vector<8x324xf32>
    %c8 = arith.constant 8 : index
    %c0_27 = arith.constant 0 : index
    %c0_28 = arith.constant 0 : index
    %43 = vector.load %arg3[%c8, %c0_27, %c0_28] : memref<9x8x4xf32, #tpu.memory_space<vmem>>, vector<1x8x4xf32>
    %44 = vector.shape_cast %43 : vector<1x8x4xf32> to vector<8x4xf32>
    %45 = vector.extract_strided_slice %1 {offsets = [0, 38], sizes = [4, 324], strides = [1, 1]} : vector<4x362xf32> to vector<4x324xf32>
    %cst_29 = arith.constant dense<0.000000e+00> : vector<8x324xf32>
    %46 = tpu.matmul %44, %45, %cst_29 {dimension_numbers = #tpu.dot_dimension_numbers<[1], [0], [0], [1], [0, 0, 1, 1], [], []>} : vector<8x4xf32>, vector<4x324xf32>, vector<8x324xf32> -> vector<8x324xf32>
    %47 = arith.addf %42, %46 : vector<8x324xf32>
    %c0_30 = arith.constant 0 : index
    %c0_31 = arith.constant 0 : index
    %48 = vector.load %arg4[%c0_30, %c0_31] : memref<8x1xf32, #tpu.memory_space<vmem>>, vector<8x1xf32>
    %49 = vector.broadcast %48 : vector<8x1xf32> to vector<8x324xf32>
    %50 = arith.addf %47, %49 : vector<8x324xf32>
    %cst_32 = arith.constant 0.000000e+00 : f32
    %51 = vector.broadcast %cst_32 : f32 to vector<8x324xf32>
    %52 = arith.maximumf %50, %51 : vector<8x324xf32>
    %c0_33 = arith.constant 0 : index
    %c0_34 = arith.constant 0 : index
    %53 = vector.load %arg2[%c0_33, %c0_34] : memref<1x324xf32, #tpu.memory_space<vmem>>, vector<1x324xf32>
    %54 = vector.broadcast %53 : vector<1x324xf32> to vector<8x324xf32>
    %55 = arith.mulf %52, %54 : vector<8x324xf32>
    %cst_35 = arith.constant dense<0.000000e+00> : vector<8xf32>
    %56 = vector.multi_reduction <add>, %55, %cst_35 [1] : vector<8x324xf32> to vector<8xf32>
    %57 = vector.shape_cast %56 : vector<8xf32> to vector<8x1xf32>
    %cst_36 = arith.constant 3.906250e-03 : f32
    %58 = vector.broadcast %cst_36 : f32 to vector<8x1xf32>
    %59 = arith.mulf %57, %58 : vector<8x1xf32>
    %c0_37 = arith.constant 0 : index
    %c0_38 = arith.constant 0 : index
    %60 = vector.load %arg5[%c0_37, %c0_38] : memref<32x8xf32, #tpu.memory_space<vmem>>, vector<32x8xf32>
    %cst_39 = arith.constant dense<0.000000e+00> : vector<32x1xf32>
    %61 = tpu.matmul %60, %59, %cst_39 {dimension_numbers = #tpu.dot_dimension_numbers<[1], [0], [0], [1], [0, 0, 1, 1], [], []>} : vector<32x8xf32>, vector<8x1xf32>, vector<32x1xf32> -> vector<32x1xf32>
    %c0_40 = arith.constant 0 : index
    %c0_41 = arith.constant 0 : index
    %62 = vector.load %arg6[%c0_40, %c0_41] : memref<32x1xf32, #tpu.memory_space<vmem>>, vector<32x1xf32>
    %63 = arith.addf %61, %62 : vector<32x1xf32>
    %c0_42 = arith.constant 0 : index
    %c0_43 = arith.constant 0 : index
    %c0_44 = arith.constant 0 : index
    %64 = vector.load %arg7[%c0_42, %c0_43, %c0_44] : memref<1x32x1xf32, #tpu.memory_space<vmem>>, vector<1x32x1xf32>
    %65 = vector.shape_cast %64 : vector<1x32x1xf32> to vector<32x1xf32>
    %66 = vector.shape_cast %63 : vector<32x1xf32> to vector<1x32x1xf32>
    tpu.vector_store %arg7[%c0_42, %c0_43, %c0_44], %66 {strides = array<i32>} : memref<1x32x1xf32, #tpu.memory_space<vmem>>, vector<1x32x1xf32>,
    return
  }
  func.func @transform_0(%arg0: i32) -> (i32, i32, i32) {
    %c0_i32 = arith.constant 0 : i32
    %c0_i32_0 = arith.constant 0 : i32
    %c0_i32_1 = arith.constant 0 : i32
    return %arg0, %c0_i32, %c0_i32_0 : i32, i32, i32
  }
  func.func @transform_1(%arg0: i32) -> (i32, i32) {
    %c0_i32 = arith.constant 0 : i32
    %c0_i32_0 = arith.constant 0 : i32
    %c0_i32_1 = arith.constant 0 : i32
    return %c0_i32, %c0_i32_0 : i32, i32
  }
  func.func @transform_2(%arg0: i32) -> (i32, i32, i32) {
    %c0_i32 = arith.constant 0 : i32
    %c0_i32_0 = arith.constant 0 : i32
    %c0_i32_1 = arith.constant 0 : i32
    %c0_i32_2 = arith.constant 0 : i32
    return %c0_i32, %c0_i32_0, %c0_i32_1 : i32, i32, i32
  }
  func.func @transform_3(%arg0: i32) -> (i32, i32) {
    %c0_i32 = arith.constant 0 : i32
    %c0_i32_0 = arith.constant 0 : i32
    %c0_i32_1 = arith.constant 0 : i32
    return %c0_i32, %c0_i32_0 : i32, i32
  }
  func.func @transform_4(%arg0: i32) -> (i32, i32) {
    %c0_i32 = arith.constant 0 : i32
    %c0_i32_0 = arith.constant 0 : i32
    %c0_i32_1 = arith.constant 0 : i32
    return %c0_i32, %c0_i32_0 : i32, i32
  }
  func.func @transform_5(%arg0: i32) -> (i32, i32) {
    %c0_i32 = arith.constant 0 : i32
    %c0_i32_0 = arith.constant 0 : i32
    %c0_i32_1 = arith.constant 0 : i32
    return %c0_i32, %c0_i32_0 : i32, i32
  }
  func.func @transform_6(%arg0: i32) -> (i32, i32, i32) {
    %c0_i32 = arith.constant 0 : i32
    %c0_i32_0 = arith.constant 0 : i32
    %c0_i32_1 = arith.constant 0 : i32
    return %arg0, %c0_i32, %c0_i32_0 : i32, i32, i32
  }
}

</mosaic_0001>

<llo_original>
// kernel: my_model_forward.1
$region0: #{my_model_forward.1}
  #allocation0 [shape = 'u32[]', space=smem, size = 0x4, offset = 0x4, fixed_abs, tag = 'smem constant byte address 0x4 - core index']
  #allocation1 [shape = 'u32[72,128]{1,0:T(1,128)}', space=vmem, size = 0x9000, scoped, tag = 'internal scratch']
  %s0 = inlined_call_operand.vmem [shape: f32[2,4,362], index: 0, kind: input, shape index: {}]
  %s1 = inlined_call_operand.vmem [shape: f32[1,324], index: 1, kind: input, shape index: {}]
  %s2 = inlined_call_operand.vmem [shape: f32[9,8,4], index: 2, kind: input, shape index: {}]
  %s3 = inlined_call_operand.vmem [shape: f32[8,1], index: 3, kind: input, shape index: {}]
  %s4 = inlined_call_operand.vmem [shape: f32[32,8], index: 4, kind: input, shape index: {}]
  %s5 = inlined_call_operand.vmem [shape: f32[32,1], index: 5, kind: input, shape index: {}]
  %s6 = inlined_call_operand.vmem [shape: f32[2,32,1], index: 6, kind: output, shape index: {}]
  %s7 = sld [smem:[#allocation0]]
  $region57: #{my_model_forward.1} parent=0
    _
  %s9 = ssub.s32 1, %s7
  %s10 = scalar_select 0, %s9, %s7
  loop: start=0, step=1, limit=4
  $region2: #{my_model_forward.1} parent=0 // loop_pre_header
    _
  $region3: #{my_model_forward.1} parent=0 // loop_header
    %s12 = sphi 0, %s16
    %p13 = scmp.ge.s32.totalorder %s12, 4
    %s22 = sphi 0, %s24
    %s25 = sphi 0, %s22
    %s26 = sphi 0, %s25
    %s42 = sphi 0, %s26
    %s46 = sphi 0, %s46
    %s48 = sphi 0, %s46
    %s49 = sphi 0, %s48
    %s63 = sphi 0, %s49
    %s67 = sphi 0, %s67
    %s69 = sphi 0, %s67
    %s70 = sphi 0, %s69
    %s84 = sphi 0, %s70
    %s88 = sphi 0, %s88
    %s90 = sphi 0, %s88
    %s91 = sphi 0, %s90
    %s105 = sphi 0, %s91
    %s109 = sphi 0, %s109
    %s111 = sphi 0, %s109
    %s112 = sphi 0, %s111
    %s126 = sphi 0, %s112
    %s130 = sphi 0, %s130
    %s132 = sphi 0, %s130
    %s133 = sphi 0, %s132
    %s147 = sphi 0, %s133
    %s153 = sphi 0, %s155
    %s156 = sphi 0, %s153
    %s157 = sphi 0, %s156
    %s173 = sphi 0, %s157
  $region4: #{my_model_forward.1} parent=0 // loop_header_branch
    %15 = sbr.rel (%p13) target = $region8
  $region5: #{my_model_forward.1} parent=0 // loop_body
    %s17 = ssub.s32 %s12, 1
    %s18 = ssub.s32 %s12, 2
    %s19 = sadd.s32 %s12, 1
    %s20 = ssub.s32 %s12, %s19
    %p21 = scmp.eq.s32.totalorder %s20, 0
    %s23 = sadd.s32 %s22, 1
    %s24 = scalar_select %p21, %s22, %s23
    %p27 = pneg %p21
    %p28 = scmp.eq.s32.totalorder %s12, 1
    %p29 = por %p27, %p28
    %p30 = scmp.ne.s32.totalorder %s22, %s25
    %p31 = scmp.eq.s32.totalorder %s12, 0
    %p32 = por %p30, %p31
    %p33 = scmp.ne.s32.totalorder %s22, %s25
    %p34 = scmp.eq.s32.totalorder %s17, 1
    %p35 = por %p33, %p34
    %p36 = scmp.ne.s32.totalorder %s25, %s26
    %p37 = scmp.eq.s32.totalorder %s17, 0
    %p38 = por %p36, %p37
    %p39 = scmp.ne.s32.totalorder %s25, %s26
    %p40 = scmp.eq.s32.totalorder %s18, 1
    %p41 = por %p39, %p40
    %p43 = scmp.ne.s32.totalorder %s26, %s42
    %p44 = scmp.eq.s32.totalorder %s18, 0
    %p45 = por %p43, %p44
    %s47 = sadd.s32 %s46, 1
    %p50 = scmp.eq.s32.totalorder %s12, 1
    %p51 = scmp.ne.s32.totalorder %s46, %s48
    %p52 = scmp.eq.s32.totalorder %s12, 0
    %p53 = por %p51, %p52
    %p54 = scmp.ne.s32.totalorder %s46, %s48
    %p55 = scmp.eq.s32.totalorder %s17, 1
    %p56 = por %p54, %p55
    %p57 = scmp.ne.s32.totalorder %s48, %s49
    %p58 = scmp.eq.s32.totalorder %s17, 0
    %p59 = por %p57, %p58
    %p60 = scmp.ne.s32.totalorder %s48, %s49
    %p61 = scmp.eq.s32.totalorder %s18, 1
    %p62 = por %p60, %p61
    %p64 = scmp.ne.s32.totalorder %s49, %s63
    %p65 = scmp.eq.s32.totalorder %s18, 0
    %p66 = por %p64, %p65
    %s68 = sadd.s32 %s67, 1
    %p71 = scmp.eq.s32.totalorder %s12, 1
    %p72 = scmp.ne.s32.totalorder %s67, %s69
    %p73 = scmp.eq.s32.totalorder %s12, 0
    %p74 = por %p72, %p73
    %p75 = scmp.ne.s32.totalorder %s67, %s69
    %p76 = scmp.eq.s32.totalorder %s17, 1
    %p77 = por %p75, %p76
    %p78 = scmp.ne.s32.totalorder %s69, %s70
    %p79 = scmp.eq.s32.totalorder %s17, 0
    %p80 = por %p78, %p79
    %p81 = scmp.ne.s32.totalorder %s69, %s70
    %p82 = scmp.eq.s32.totalorder %s18, 1
    %p83 = por %p81, %p82
    %p85 = scmp.ne.s32.totalorder %s70, %s84
    %p86 = scmp.eq.s32.totalorder %s18, 0
    %p87 = por %p85, %p86
    %s89 = sadd.s32 %s88, 1
    %p92 = scmp.eq.s32.totalorder %s12, 1
    %p93 = scmp.ne.s32.totalorder %s88, %s90
    %p94 = scmp.eq.s32.totalorder %s12, 0
    %p95 = por %p93, %p94
    %p96 = scmp.ne.s32.totalorder %s88, %s90
    %p97 = scmp.eq.s32.totalorder %s17, 1
    %p98 = por %p96, %p97
    %p99 = scmp.ne.s32.totalorder %s90, %s91
    %p100 = scmp.eq.s32.totalorder %s17, 0
    %p101 = por %p99, %p100
    %p102 = scmp.ne.s32.totalorder %s90, %s91
    %p103 = scmp.eq.s32.totalorder %s18, 1
    %p104 = por %p102, %p103
    %p106 = scmp.ne.s32.totalorder %s91, %s105
    %p107 = scmp.eq.s32.totalorder %s18, 0
    %p108 = por %p106, %p107
    %s110 = sadd.s32 %s109, 1
    %p113 = scmp.eq.s32.totalorder %s12, 1
    %p114 = scmp.ne.s32.totalorder %s109, %s111
    %p115 = scmp.eq.s32.totalorder %s12, 0
    %p116 = por %p114, %p115
    %p117 = scmp.ne.s32.totalorder %s109, %s111
    %p118 = scmp.eq.s32.totalorder %s17, 1
    %p119 = por %p117, %p118
    %p120 = scmp.ne.s32.totalorder %s111, %s112
    %p121 = scmp.eq.s32.totalorder %s17, 0
    %p122 = por %p120, %p121
    %p123 = scmp.ne.s32.totalorder %s111, %s112
    %p124 = scmp.eq.s32.totalorder %s18, 1
    %p125 = por %p123, %p124
    %p127 = scmp.ne.s32.totalorder %s112, %s126
    %p128 = scmp.eq.s32.totalorder %s18, 0
    %p129 = por %p127, %p128
    %s131 = sadd.s32 %s130, 1
    %p134 = scmp.eq.s32.totalorder %s12, 1
    %p135 = scmp.ne.s32.totalorder %s130, %s132
    %p136 = scmp.eq.s32.totalorder %s12, 0
    %p137 = por %p135, %p136
    %p138 = scmp.ne.s32.totalorder %s130, %s132
    %p139 = scmp.eq.s32.totalorder %s17, 1
    %p140 = por %p138, %p139
    %p141 = scmp.ne.s32.totalorder %s132, %s133
    %p142 = scmp.eq.s32.totalorder %s17, 0
    %p143 = por %p141, %p142
    %p144 = scmp.ne.s32.totalorder %s132, %s133
    %p145 = scmp.eq.s32.totalorder %s18, 1
    %p146 = por %p144, %p145
    %p148 = scmp.ne.s32.totalorder %s133, %s147
    %p149 = scmp.eq.s32.totalorder %s18, 0
    %p150 = por %p148, %p149
    %s151 = ssub.s32 %s12, %s19
    %p152 = scmp.eq.s32.totalorder %s151, 0
    %s154 = sadd.s32 %s153, 1
    %s155 = scalar_select %p152, %s153, %s154
    %p158 = pneg %p152
    %p159 = scmp.eq.s32.totalorder %s12, 1
    %p160 = por %p158, %p159
    %p161 = scmp.ne.s32.totalorder %s153, %s156
    %p162 = scmp.eq.s32.totalorder %s12, 0
    %p163 = por %p161, %p162
    %p164 = scmp.ne.s32.totalorder %s153, %s156
    %p165 = scmp.eq.s32.totalorder %s17, 1
    %p166 = por %p164, %p165
    %p167 = scmp.ne.s32.totalorder %s156, %s157
    %p168 = scmp.eq.s32.totalorder %s17, 0
    %p169 = por %p167, %p168
    %p170 = scmp.ne.s32.totalorder %s156, %s157
    %p171 = scmp.eq.s32.totalorder %s18, 1
    %p172 = por %p170, %p171
    %p174 = scmp.ne.s32.totalorder %s157, %s173
    %p175 = scmp.eq.s32.totalorder %s18, 0
    %p176 = por %p174, %p175
    %p177 = scmp.le.s32.totalorder 1, %s12
    %p178 = scmp.lt.s32.totalorder %s12, 3
    %p179 = pnand %p177, %p178
    %p180 = pneg %p179
    // Predicated region
    $region9: #{my_model_forward.1} parent=5 // pred_check
      _
    $region10: #{my_model_forward.1} parent=5 // pred_check_branch
      %182 = sbr.rel (%p179) target = $region12
    $region11: #{my_model_forward.1} parent=5 // pred_region
      %s183 = ssub.s32 %s12, 1
      // Predicated region
      $region13: #{my_model_forward.1} parent=11 // pred_check
        %p184 = pneg %p59
      $region14: #{my_model_forward.1} parent=11 // pred_check_branch
        %186 = sbr.rel (%p184) target = $region16
      $region15: #{my_model_forward.1} parent=11 // pred_region
        _
      $region16: #{my_model_forward.1} parent=11 // pred_fallthru
        _
      // Predicated region
      $region17: #{my_model_forward.1} parent=11 // pred_check
        %p187 = pneg %p80
      $region18: #{my_model_forward.1} parent=11 // pred_check_branch
        %189 = sbr.rel (%p187) target = $region20
      $region19: #{my_model_forward.1} parent=11 // pred_region
        _
      $region20: #{my_model_forward.1} parent=11 // pred_fallthru
        _
      // Predicated region
      $region21: #{my_model_forward.1} parent=11 // pred_check
        %p190 = pneg %p101
      $region22: #{my_model_forward.1} parent=11 // pred_check_branch
        %192 = sbr.rel (%p190) target = $region24
      $region23: #{my_model_forward.1} parent=11 // pred_region
        _
      $region24: #{my_model_forward.1} parent=11 // pred_fallthru
        _
      // Predicated region
      $region25: #{my_model_forward.1} parent=11 // pred_check
        %p193 = pneg %p122
      $region26: #{my_model_forward.1} parent=11 // pred_check_branch
        %195 = sbr.rel (%p193) target = $region28
      $region27: #{my_model_forward.1} parent=11 // pred_region
        _
      $region28: #{my_model_forward.1} parent=11 // pred_fallthru
        _
      // Predicated region
      $region29: #{my_model_forward.1} parent=11 // pred_check
        %p196 = pneg %p143
      $region30: #{my_model_forward.1} parent=11 // pred_check_branch
        %198 = sbr.rel (%p196) target = $region32
      $region31: #{my_model_forward.1} parent=11 // pred_region
        _
      $region32: #{my_model_forward.1} parent=11 // pred_fallthru
        _
    $region12: #{my_model_forward.1} parent=5 // pred_fallthru
      _
    %p199 = scmp.lt.s32.totalorder %s12, 2
    // Predicated region
    $region33: #{my_model_forward.1} parent=5 // pred_check
      %p200 = pneg %p199
    $region34: #{my_model_forward.1} parent=5 // pred_check_branch
      %202 = sbr.rel (%p200) target = $region36
    $region35: #{my_model_forward.1} parent=5 // pred_region
      // Predicated region
      $region37: #{my_model_forward.1} parent=35 // pred_check
        %p203 = pneg %p32
      $region38: #{my_model_forward.1} parent=35 // pred_check_branch
        %205 = sbr.rel (%p203) target = $region40
      $region39: #{my_model_forward.1} parent=35 // pred_region
        %p206 = scmp.lt.s32.totalorder %s12, 1
        %s207 = scalar_select %p206, %s12, 1
        %s208 = smul.addr %s207, 3
        %s209 = smul.addr %s208, 4
        %s210 = scalar_lea.vmem %s0, %s209
      $region40: #{my_model_forward.1} parent=35 // pred_fallthru
        _
    $region36: #{my_model_forward.1} parent=5 // pred_fallthru
      _
    %p211 = scmp.le.s32.totalorder 1, %s12
    %p212 = scmp.lt.s32.totalorder %s12, 3
    %p213 = pnand %p211, %p212
    %p214 = pneg %p213
    // Predicated region
    $region41: #{my_model_forward.1} parent=5 // pred_check
      _
    $region42: #{my_model_forward.1} parent=5 // pred_check_branch
      %216 = sbr.rel (%p213) target = $region44
    $region43: #{my_model_forward.1} parent=5 // pred_region
      %s217 = ssub.s32 %s12, 1
      %p218 = scmp.lt.s32.totalorder %s17, 1
      %s219 = scalar_select %p218, %s17, 1
      %s220 = smul.addr %s219, 3
      %s221 = smul.addr %s220, 4
      %s222 = scalar_lea.vmem %s0, %s221
      %p223 = pneg %p38
      %p224 = pneg %p35
      %p225 = pneg %p59
      %p226 = pneg %p56
      %p227 = pneg %p80
      %p228 = pneg %p77
      %p229 = pneg %p101
      %p230 = pneg %p98
      %p231 = pneg %p122
      %p232 = pneg %p119
      %p233 = pneg %p143
      %p234 = pneg %p140
      %p235 = pneg %p169
      %p236 = pneg %p166
      %p237 = scmp.lt.s32.totalorder %s17, 1
      %s238 = scalar_select %p237, %s17, 1
      %s239 = smul.addr %s238, 4
      %s240 = smul.addr %s239, 8
      %s241 = scalar_lea.vmem %s6, %s240
      %p242 = scmp.lt.s32.totalorder %s17, 1
      %s243 = scalar_select %p242, %s17, 1
      %s244 = smul.addr %s243, 3
      %s245 = smul.addr %s244, 4
      %s246 = scalar_lea.vmem %s0, %s245
      %p247 = scmp.lt.s32.totalorder %s17, 1
      %s248 = scalar_select %p247, %s17, 1
      %s249 = smul.addr %s248, 4
      %s250 = smul.addr %s249, 8
      %s251 = scalar_lea.vmem %s6, %s250
      %v252 = vld [vmem:[%s246] sm:$0xff]
      %v253 = vld [vmem:[%s246 + $0x8] sm:$0xf]
      %v254 = vld [vmem:[%s2] sm:$0xff]
      %s255 = scalar_lea.vmem %s2, 8
      %v256 = vld [vmem:[%s255] sm:$0xff]
      %259 = vst [vmem:[#allocation1] ss:$2 sm:$0xff] %v252
      %s260 = scalar_lea.vmem [#allocation1], 16
      %261 = vst [vmem:[%s260] ss:$2 sm:$0xff] %v253
      %v262 = vld.sshfl [vmem:[#allocation1] sm:$0xff pattern:$0x75316420]
      %v263 = vld.sshfl [vmem:[#allocation1 + $0x8] sm:$0xff pattern:$0x75316420]
      %v264 = vld.sshfl [vmem:[#allocation1 + $0x10] sm:$0xff pattern:$0x75316420]
      %265 = vrot.lane.b32.xlu0 %v262, 127
      %v266 = vpop.permute.xlu0 %265
      %267 = vrot.lane.b32.xlu0 %v263, 127
      %v268 = vpop.permute.xlu0 %267
      %269 = vrot.lane.b32.xlu0 %v264, 127
      %v270 = vpop.permute.xlu0 %269
      %vm271 = vcmask 1039360
      %v272 = vsel %vm271, %v266, %v268
      %v273 = vsel %vm271, %v268, %v270
      %vm274 = vcmask 31744
      %v276 = vsel %vm274, %v256, 0
      %vm278 = vcmask 1043456
      %v279 = vsel %vm278, %v272, 0
      %v281 = vsel %vm278, %v273, 0
      %v283 = vsel %vm278, %v270, 0
      %285 = vmatpush.msra.mxu0 0.0
      %286 = vmatpush.msra.mxu0 0.0
      %287 = vmatpush.msra.mxu0 0.0
      %288 = vmatpush.msra.mxu0 0.0
      %289 = vmatpush.msra.mxu0 0.0
      %290 = vmatpush.msra.mxu0 0.0
      %291 = vmatpush.msra.mxu0 0.0
      %292 = vmatpush.msra.mxu0 0.0
      %293 = vmatpush.msra.mxu0 0.0
      %294 = vmatpush.msra.mxu0 0.0
      %295 = vmatpush.msra.mxu0 0.0
      %296 = vmatpush.msra.mxu0 0.0
      %297 = vmatpush.msra.mxu0 0.0
      %298 = vmatpush.msra.mxu0 0.0
      %299 = vmatpush.msra.mxu0 0.0
      %300 = vmatpush.msra.mxu0 %v279
      %301 = vmatmul.f32.gmra.mxu0 %v276
      %v302 = vpop.f32.mrf.mxu0
      %v303 = vadd.f32 0.0, %v302
      %304 = vdwg.mxu0
      %305 = vmatpush.msra.mxu0 0.0
      %306 = vmatpush.msra.mxu0 0.0
      %307 = vmatpush.msra.mxu0 0.0
      %308 = vmatpush.msra.mxu0 0.0
      %309 = vmatpush.msra.mxu0 0.0
      %310 = vmatpush.msra.mxu0 0.0
      %311 = vmatpush.msra.mxu0 0.0
      %312 = vmatpush.msra.mxu0 0.0
      %313 = vmatpush.msra.mxu0 0.0
      %314 = vmatpush.msra.mxu0 0.0
      %315 = vmatpush.msra.mxu0 0.0
      %316 = vmatpush.msra.mxu0 0.0
      %317 = vmatpush.msra.mxu0 0.0
      %318 = vmatpush.msra.mxu0 0.0
      %319 = vmatpush.msra.mxu0 0.0
      %320 = vmatpush.msra.mxu0 %v281
      %321 = vmatmul.f32.gmra.mxu0 %v276
      %v322 = vpop.f32.mrf.mxu0
      %v323 = vadd.f32 0.0, %v322
      %324 = vdwg.mxu0
      %325 = vmatpush.msra.mxu0 0.0
      %326 = vmatpush.msra.mxu0 0.0
      %327 = vmatpush.msra.mxu0 0.0
      %328 = vmatpush.msra.mxu0 0.0
      %329 = vmatpush.msra.mxu0 0.0
      %330 = vmatpush.msra.mxu0 0.0
      %331 = vmatpush.msra.mxu0 0.0
      %332 = vmatpush.msra.mxu0 0.0
      %333 = vmatpush.msra.mxu0 0.0
      %334 = vmatpush.msra.mxu0 0.0
      %335 = vmatpush.msra.mxu0 0.0
      %336 = vmatpush.msra.mxu0 0.0
      %337 = vmatpush.msra.mxu0 0.0
      %338 = vmatpush.msra.mxu0 0.0
      %339 = vmatpush.msra.mxu0 0.0
      %340 = vmatpush.msra.mxu0 %v283
      %341 = vmatmul.f32.gmra.mxu0 %v276
      %v342 = vpop.f32.mrf.mxu0
      %v343 = vadd.f32 0.0, %v342
      %344 = vdwg.mxu0
      %345 = vst [vmem:[#allocation1] ss:$2 sm:$0xff] %v252
      %s346 = scalar_lea.vmem [#allocation1], 16
      %347 = vst [vmem:[%s346] ss:$2 sm:$0xff] %v253
      %v348 = vld.sshfl [vmem:[#allocation1] sm:$0xff pattern:$0x75316420]
      %v349 = vld.sshfl [vmem:[#allocation1 + $0x8] sm:$0xff pattern:$0x75316420]
      %v350 = vld.sshfl [vmem:[#allocation1 + $0x10] sm:$0xff pattern:$0x75316420]
      %v352 = vsel %vm274, %v254, 0
      %v354 = vsel %vm278, %v348, 0
      %v356 = vsel %vm278, %v349, 0
      %v358 = vsel %vm278, %v350, 0
      %360 = vmatpush.msra.mxu0 0.0
      %361 = vmatpush.msra.mxu0 0.0
      %362 = vmatpush.msra.mxu0 0.0
      %363 = vmatpush.msra.mxu0 0.0
      %364 = vmatpush.msra.mxu0 0.0
      %365 = vmatpush.msra.mxu0 0.0
      %366 = vmatpush.msra.mxu0 0.0
      %367 = vmatpush.msra.mxu0 0.0
      %368 = vmatpush.msra.mxu0 0.0
      %369 = vmatpush.msra.mxu0 0.0
      %370 = vmatpush.msra.mxu0 0.0
      %371 = vmatpush.msra.mxu0 0.0
      %372 = vmatpush.msra.mxu0 0.0
      %373 = vmatpush.msra.mxu0 0.0
      %374 = vmatpush.msra.mxu0 0.0
      %375 = vmatpush.msra.mxu0 %v354
      %376 = vmatmul.f32.gmra.mxu0 %v352
      %v377 = vpop.f32.mrf.mxu0
      %v378 = vadd.f32 %v303, %v377
      %379 = vdwg.mxu0
      %380 = vmatpush.msra.mxu0 0.0
      %381 = vmatpush.msra.mxu0 0.0
      %382 = vmatpush.msra.mxu0 0.0
      %383 = vmatpush.msra.mxu0 0.0
      %384 = vmatpush.msra.mxu0 0.0
      %385 = vmatpush.msra.mxu0 0.0
      %386 = vmatpush.msra.mxu0 0.0
      %387 = vmatpush.msra.mxu0 0.0
      %388 = vmatpush.msra.mxu0 0.0
      %389 = vmatpush.msra.mxu0 0.0
      %390 = vmatpush.msra.mxu0 0.0
      %391 = vmatpush.msra.mxu0 0.0
      %392 = vmatpush.msra.mxu0 0.0
      %393 = vmatpush.msra.mxu0 0.0
      %394 = vmatpush.msra.mxu0 0.0
      %395 = vmatpush.msra.mxu0 %v356
      %396 = vmatmul.f32.gmra.mxu0 %v352
      %v397 = vpop.f32.mrf.mxu0
      %v398 = vadd.f32 %v323, %v397
      %399 = vdwg.mxu0
      %400 = vmatpush.msra.mxu0 0.0
      %401 = vmatpush.msra.mxu0 0.0
      %402 = vmatpush.msra.mxu0 0.0
      %403 = vmatpush.msra.mxu0 0.0
      %404 = vmatpush.msra.mxu0 0.0
      %405 = vmatpush.msra.mxu0 0.0
      %406 = vmatpush.msra.mxu0 0.0
      %407 = vmatpush.msra.mxu0 0.0
      %408 = vmatpush.msra.mxu0 0.0
      %409 = vmatpush.msra.mxu0 0.0
      %410 = vmatpush.msra.mxu0 0.0
      %411 = vmatpush.msra.mxu0 0.0
      %412 = vmatpush.msra.mxu0 0.0
      %413 = vmatpush.msra.mxu0 0.0
      %414 = vmatpush.msra.mxu0 0.0
      %415 = vmatpush.msra.mxu0 %v358
      %416 = vmatmul.f32.gmra.mxu0 %v352
      %v417 = vpop.f32.mrf.mxu0
      %v418 = vadd.f32 %v343, %v417
      %419 = vdwg.mxu0
      %s420 = scalar_lea.vmem %s2, 16
      %v421 = vld [vmem:[%s420] sm:$0xff]
      %422 = vst [vmem:[#allocation1] ss:$2 sm:$0xff] %v252
      %s423 = scalar_lea.vmem [#allocation1], 16
      %424 = vst [vmem:[%s423] ss:$2 sm:$0xff] %v253
      %v425 = vld.sshfl [vmem:[#allocation1] sm:$0xff pattern:$0x75316420]
      %v426 = vld.sshfl [vmem:[#allocation1 + $0x8] sm:$0xff pattern:$0x75316420]
      %v427 = vld.sshfl [vmem:[#allocation1 + $0x10] sm:$0xff pattern:$0x75316420]
      %428 = vrot.lane.b32.xlu0 %v425, 126
      %v429 = vpop.permute.xlu0 %428
      %430 = vrot.lane.b32.xlu0 %v426, 126
      %v431 = vpop.permute.xlu0 %430
      %432 = vrot.lane.b32.xlu0 %v427, 126
      %v433 = vpop.permute.xlu0 %432
      %vm434 = vcmask 1031168
      %v435 = vsel %vm434, %v429, %v431
      %v436 = vsel %vm434, %v431, %v433
      %v438 = vsel %vm274, %v421, 0
      %v440 = vsel %vm278, %v435, 0
      %v442 = vsel %vm278, %v436, 0
      %v444 = vsel %vm278, %v433, 0
      %446 = vmatpush.msra.mxu0 0.0
      %447 = vmatpush.msra.mxu0 0.0
      %448 = vmatpush.msra.mxu0 0.0
      %449 = vmatpush.msra.mxu0 0.0
      %450 = vmatpush.msra.mxu0 0.0
      %451 = vmatpush.msra.mxu0 0.0
      %452 = vmatpush.msra.mxu0 0.0
      %453 = vmatpush.msra.mxu0 0.0
      %454 = vmatpush.msra.mxu0 0.0
      %455 = vmatpush.msra.mxu0 0.0
      %456 = vmatpush.msra.mxu0 0.0
      %457 = vmatpush.msra.mxu0 0.0
      %458 = vmatpush.msra.mxu0 0.0
      %459 = vmatpush.msra.mxu0 0.0
      %460 = vmatpush.msra.mxu0 0.0
      %461 = vmatpush.msra.mxu0 %v440
      %462 = vmatmul.f32.gmra.mxu0 %v438
      %v463 = vpop.f32.mrf.mxu0
      %v464 = vadd.f32 0.0, %v463
      %465 = vdwg.mxu0
      %466 = vmatpush.msra.mxu0 0.0
      %467 = vmatpush.msra.mxu0 0.0
      %468 = vmatpush.msra.mxu0 0.0
      %469 = vmatpush.msra.mxu0 0.0
      %470 = vmatpush.msra.mxu0 0.0
      %471 = vmatpush.msra.mxu0 0.0
      %472 = vmatpush.msra.mxu0 0.0
      %473 = vmatpush.msra.mxu0 0.0
      %474 = vmatpush.msra.mxu0 0.0
      %475 = vmatpush.msra.mxu0 0.0
      %476 = vmatpush.msra.mxu0 0.0
      %477 = vmatpush.msra.mxu0 0.0
      %478 = vmatpush.msra.mxu0 0.0
      %479 = vmatpush.msra.mxu0 0.0
      %480 = vmatpush.msra.mxu0 0.0
      %481 = vmatpush.msra.mxu0 %v442
      %482 = vmatmul.f32.gmra.mxu0 %v438
      %v483 = vpop.f32.mrf.mxu0
      %v484 = vadd.f32 0.0, %v483
      %485 = vdwg.mxu0
      %486 = vmatpush.msra.mxu0 0.0
      %487 = vmatpush.msra.mxu0 0.0
      %488 = vmatpush.msra.mxu0 0.0
      %489 = vmatpush.msra.mxu0 0.0
      %490 = vmatpush.msra.mxu0 0.0
      %491 = vmatpush.msra.mxu0 0.0
      %492 = vmatpush.msra.mxu0 0.0
      %493 = vmatpush.msra.mxu0 0.0
      %494 = vmatpush.msra.mxu0 0.0
      %495 = vmatpush.msra.mxu0 0.0
      %496 = vmatpush.msra.mxu0 0.0
      %497 = vmatpush.msra.mxu0 0.0
      %498 = vmatpush.msra.mxu0 0.0
      %499 = vmatpush.msra.mxu0 0.0
      %500 = vmatpush.msra.mxu0 0.0
      %501 = vmatpush.msra.mxu0 %v444
      %502 = vmatmul.f32.gmra.mxu0 %v438
      %v503 = vpop.f32.mrf.mxu0
      %v504 = vadd.f32 0.0, %v503
      %505 = vdwg.mxu0
      %v506 = vadd.f32 %v378, %v464
      %v507 = vadd.f32 %v398, %v484
      %v508 = vadd.f32 %v418, %v504
      %s509 = scalar_lea.vmem %s2, 24
      %v510 = vld [vmem:[%s509] sm:$0xff]
      %511 = vst [vmem:[#allocation1] ss:$2 sm:$0xff] %v252
      %s512 = scalar_lea.vmem [#allocation1], 16
      %513 = vst [vmem:[%s512] ss:$2 sm:$0xff] %v253
      %v514 = vld.sshfl [vmem:[#allocation1] sm:$0xff pattern:$0x75316420]
      %v515 = vld.sshfl [vmem:[#allocation1 + $0x8] sm:$0xff pattern:$0x75316420]
      %v516 = vld.sshfl [vmem:[#allocation1 + $0x10] sm:$0xff pattern:$0x75316420]
      %517 = vrot.lane.b32.xlu0 %v514, 110
      %v518 = vpop.permute.xlu0 %517
      %519 = vrot.lane.b32.xlu0 %v515, 110
      %v520 = vpop.permute.xlu0 %519
      %521 = vrot.lane.b32.xlu0 %v516, 110
      %v522 = vpop.permute.xlu0 %521
      %vm523 = vcmask 900096
      %v524 = vsel %vm523, %v518, %v520
      %v525 = vsel %vm523, %v520, %v522
      %v527 = vsel %vm274, %v510, 0
      %v529 = vsel %vm278, %v524, 0
      %v531 = vsel %vm278, %v525, 0
      %v533 = vsel %vm278, %v522, 0
      %535 = vmatpush.msra.mxu0 0.0
      %536 = vmatpush.msra.mxu0 0.0
      %537 = vmatpush.msra.mxu0 0.0
      %538 = vmatpush.msra.mxu0 0.0
      %539 = vmatpush.msra.mxu0 0.0
      %540 = vmatpush.msra.mxu0 0.0
      %541 = vmatpush.msra.mxu0 0.0
      %542 = vmatpush.msra.mxu0 0.0
      %543 = vmatpush.msra.mxu0 0.0
      %544 = vmatpush.msra.mxu0 0.0
      %545 = vmatpush.msra.mxu0 0.0
      %546 = vmatpush.msra.mxu0 0.0
      %547 = vmatpush.msra.mxu0 0.0
      %548 = vmatpush.msra.mxu0 0.0
      %549 = vmatpush.msra.mxu0 0.0
      %550 = vmatpush.msra.mxu0 %v529
      %551 = vmatmul.f32.gmra.mxu0 %v527
      %v552 = vpop.f32.mrf.mxu0
      %v553 = vadd.f32 0.0, %v552
      %554 = vdwg.mxu0
      %555 = vmatpush.msra.mxu0 0.0
      %556 = vmatpush.msra.mxu0 0.0
      %557 = vmatpush.msra.mxu0 0.0
      %558 = vmatpush.msra.mxu0 0.0
      %559 = vmatpush.msra.mxu0 0.0
      %560 = vmatpush.msra.mxu0 0.0
      %561 = vmatpush.msra.mxu0 0.0
      %562 = vmatpush.msra.mxu0 0.0
      %563 = vmatpush.msra.mxu0 0.0
      %564 = vmatpush.msra.mxu0 0.0
      %565 = vmatpush.msra.mxu0 0.0
      %566 = vmatpush.msra.mxu0 0.0
      %567 = vmatpush.msra.mxu0 0.0
      %568 = vmatpush.msra.mxu0 0.0
      %569 = vmatpush.msra.mxu0 0.0
      %570 = vmatpush.msra.mxu0 %v531
      %571 = vmatmul.f32.gmra.mxu0 %v527
      %v572 = vpop.f32.mrf.mxu0
      %v573 = vadd.f32 0.0, %v572
      %574 = vdwg.mxu0
      %575 = vmatpush.msra.mxu0 0.0
      %576 = vmatpush.msra.mxu0 0.0
      %577 = vmatpush.msra.mxu0 0.0
      %578 = vmatpush.msra.mxu0 0.0
      %579 = vmatpush.msra.mxu0 0.0
      %580 = vmatpush.msra.mxu0 0.0
      %581 = vmatpush.msra.mxu0 0.0
      %582 = vmatpush.msra.mxu0 0.0
      %583 = vmatpush.msra.mxu0 0.0
      %584 = vmatpush.msra.mxu0 0.0
      %585 = vmatpush.msra.mxu0 0.0
      %586 = vmatpush.msra.mxu0 0.0
      %587 = vmatpush.msra.mxu0 0.0
      %588 = vmatpush.msra.mxu0 0.0
      %589 = vmatpush.msra.mxu0 0.0
      %590 = vmatpush.msra.mxu0 %v533
      %591 = vmatmul.f32.gmra.mxu0 %v527
      %v592 = vpop.f32.mrf.mxu0
      %v593 = vadd.f32 0.0, %v592
      %594 = vdwg.mxu0
      %v595 = vadd.f32 %v506, %v553
      %v596 = vadd.f32 %v507, %v573
      %v597 = vadd.f32 %v508, %v593
      %s598 = scalar_lea.vmem %s2, 32
      %v599 = vld [vmem:[%s598] sm:$0xff]
      %600 = vst [vmem:[#allocation1] ss:$2 sm:$0xff] %v252
      %s601 = scalar_lea.vmem [#allocation1], 16
      %602 = vst [vmem:[%s601] ss:$2 sm:$0xff] %v253
      %v603 = vld.sshfl [vmem:[#allocation1] sm:$0xff pattern:$0x75316420]
      %v604 = vld.sshfl [vmem:[#allocation1 + $0x8] sm:$0xff pattern:$0x75316420]
      %v605 = vld.sshfl [vmem:[#allocation1 + $0x10] sm:$0xff pattern:$0x75316420]
      %606 = vrot.lane.b32.xlu0 %v603, 109
      %v607 = vpop.permute.xlu0 %606
      %608 = vrot.lane.b32.xlu0 %v604, 109
      %v609 = vpop.permute.xlu0 %608
      %610 = vrot.lane.b32.xlu0 %v605, 109
      %v611 = vpop.permute.xlu0 %610
      %vm612 = vcmask 891904
      %v613 = vsel %vm612, %v607, %v609
      %v614 = vsel %vm612, %v609, %v611
      %v616 = vsel %vm274, %v599, 0
      %v618 = vsel %vm278, %v613, 0
      %v620 = vsel %vm278, %v614, 0
      %v622 = vsel %vm278, %v611, 0
      %624 = vmatpush.msra.mxu0 0.0
      %625 = vmatpush.msra.mxu0 0.0
      %626 = vmatpush.msra.mxu0 0.0
      %627 = vmatpush.msra.mxu0 0.0
      %628 = vmatpush.msra.mxu0 0.0
      %629 = vmatpush.msra.mxu0 0.0
      %630 = vmatpush.msra.mxu0 0.0
      %631 = vmatpush.msra.mxu0 0.0
      %632 = vmatpush.msra.mxu0 0.0
      %633 = vmatpush.msra.mxu0 0.0
      %634 = vmatpush.msra.mxu0 0.0
      %635 = vmatpush.msra.mxu0 0.0
      %636 = vmatpush.msra.mxu0 0.0
      %637 = vmatpush.msra.mxu0 0.0
      %638 = vmatpush.msra.mxu0 0.0
      %639 = vmatpush.msra.mxu0 %v618
      %640 = vmatmul.f32.gmra.mxu0 %v616
      %v641 = vpop.f32.mrf.mxu0
      %v642 = vadd.f32 0.0, %v641
      %643 = vdwg.mxu0
      %644 = vmatpush.msra.mxu0 0.0
      %645 = vmatpush.msra.mxu0 0.0
      %646 = vmatpush.msra.mxu0 0.0
      %647 = vmatpush.msra.mxu0 0.0
      %648 = vmatpush.msra.mxu0 0.0
      %649 = vmatpush.msra.mxu0 0.0
      %650 = vmatpush.msra.mxu0 0.0
      %651 = vmatpush.msra.mxu0 0.0
      %652 = vmatpush.msra.mxu0 0.0
      %653 = vmatpush.msra.mxu0 0.0
      %654 = vmatpush.msra.mxu0 0.0
      %655 = vmatpush.msra.mxu0 0.0
      %656 = vmatpush.msra.mxu0 0.0
      %657 = vmatpush.msra.mxu0 0.0
      %658 = vmatpush.msra.mxu0 0.0
      %659 = vmatpush.msra.mxu0 %v620
      %660 = vmatmul.f32.gmra.mxu0 %v616
      %v661 = vpop.f32.mrf.mxu0
      %v662 = vadd.f32 0.0, %v661
      %663 = vdwg.mxu0
      %664 = vmatpush.msra.mxu0 0.0
      %665 = vmatpush.msra.mxu0 0.0
      %666 = vmatpush.msra.mxu0 0.0
      %667 = vmatpush.msra.mxu0 0.0
      %668 = vmatpush.msra.mxu0 0.0
      %669 = vmatpush.msra.mxu0 0.0
      %670 = vmatpush.msra.mxu0 0.0
      %671 = vmatpush.msra.mxu0 0.0
      %672 = vmatpush.msra.mxu0 0.0
      %673 = vmatpush.msra.mxu0 0.0
      %674 = vmatpush.msra.mxu0 0.0
      %675 = vmatpush.msra.mxu0 0.0
      %676 = vmatpush.msra.mxu0 0.0
      %677 = vmatpush.msra.mxu0 0.0
      %678 = vmatpush.msra.mxu0 0.0
      %679 = vmatpush.msra.mxu0 %v622
      %680 = vmatmul.f32.gmra.mxu0 %v616
      %v681 = vpop.f32.mrf.mxu0
      %v682 = vadd.f32 0.0, %v681
      %683 = vdwg.mxu0
      %v684 = vadd.f32 %v595, %v642
      %v685 = vadd.f32 %v596, %v662
      %v686 = vadd.f32 %v597, %v682
      %s687 = scalar_lea.vmem %s2, 40
      %v688 = vld [vmem:[%s687] sm:$0xff]
      %689 = vst [vmem:[#allocation1] ss:$2 sm:$0xff] %v252
      %s690 = scalar_lea.vmem [#allocation1], 16
      %691 = vst [vmem:[%s690] ss:$2 sm:$0xff] %v253
      %v692 = vld.sshfl [vmem:[#allocation1] sm:$0xff pattern:$0x75316420]
      %v693 = vld.sshfl [vmem:[#allocation1 + $0x8] sm:$0xff pattern:$0x75316420]
      %v694 = vld.sshfl [vmem:[#allocation1 + $0x10] sm:$0xff pattern:$0x75316420]
      %695 = vrot.lane.b32.xlu0 %v692, 108
      %v696 = vpop.permute.xlu0 %695
      %697 = vrot.lane.b32.xlu0 %v693, 108
      %v698 = vpop.permute.xlu0 %697
      %699 = vrot.lane.b32.xlu0 %v694, 108
      %v700 = vpop.permute.xlu0 %699
      %vm701 = vcmask 883712
      %v702 = vsel %vm701, %v696, %v698
      %v703 = vsel %vm701, %v698, %v700
      %v705 = vsel %vm274, %v688, 0
      %v707 = vsel %vm278, %v702, 0
      %v709 = vsel %vm278, %v703, 0
      %v711 = vsel %vm278, %v700, 0
      %713 = vmatpush.msra.mxu0 0.0
      %714 = vmatpush.msra.mxu0 0.0
      %715 = vmatpush.msra.mxu0 0.0
      %716 = vmatpush.msra.mxu0 0.0
      %717 = vmatpush.msra.mxu0 0.0
      %718 = vmatpush.msra.mxu0 0.0
      %719 = vmatpush.msra.mxu0 0.0
      %720 = vmatpush.msra.mxu0 0.0
      %721 = vmatpush.msra.mxu0 0.0
      %722 = vmatpush.msra.mxu0 0.0
      %723 = vmatpush.msra.mxu0 0.0
      %724 = vmatpush.msra.mxu0 0.0
      %725 = vmatpush.msra.mxu0 0.0
      %726 = vmatpush.msra.mxu0 0.0
      %727 = vmatpush.msra.mxu0 0.0
      %728 = vmatpush.msra.mxu0 %v707
      %729 = vmatmul.f32.gmra.mxu0 %v705
      %v730 = vpop.f32.mrf.mxu0
      %v731 = vadd.f32 0.0, %v730
      %732 = vdwg.mxu0
      %733 = vmatpush.msra.mxu0 0.0
      %734 = vmatpush.msra.mxu0 0.0
      %735 = vmatpush.msra.mxu0 0.0
      %736 = vmatpush.msra.mxu0 0.0
      %737 = vmatpush.msra.mxu0 0.0
      %738 = vmatpush.msra.mxu0 0.0
      %739 = vmatpush.msra.mxu0 0.0
      %740 = vmatpush.msra.mxu0 0.0
      %741 = vmatpush.msra.mxu0 0.0
      %742 = vmatpush.msra.mxu0 0.0
      %743 = vmatpush.msra.mxu0 0.0
      %744 = vmatpush.msra.mxu0 0.0
      %745 = vmatpush.msra.mxu0 0.0
      %746 = vmatpush.msra.mxu0 0.0
      %747 = vmatpush.msra.mxu0 0.0
      %748 = vmatpush.msra.mxu0 %v709
      %749 = vmatmul.f32.gmra.mxu0 %v705
      %v750 = vpop.f32.mrf.mxu0
      %v751 = vadd.f32 0.0, %v750
      %752 = vdwg.mxu0
      %753 = vmatpush.msra.mxu0 0.0
      %754 = vmatpush.msra.mxu0 0.0
      %755 = vmatpush.msra.mxu0 0.0
      %756 = vmatpush.msra.mxu0 0.0
      %757 = vmatpush.msra.mxu0 0.0
      %758 = vmatpush.msra.mxu0 0.0
      %759 = vmatpush.msra.mxu0 0.0
      %760 = vmatpush.msra.mxu0 0.0
      %761 = vmatpush.msra.mxu0 0.0
      %762 = vmatpush.msra.mxu0 0.0
      %763 = vmatpush.msra.mxu0 0.0
      %764 = vmatpush.msra.mxu0 0.0
      %765 = vmatpush.msra.mxu0 0.0
      %766 = vmatpush.msra.mxu0 0.0
      %767 = vmatpush.msra.mxu0 0.0
      %768 = vmatpush.msra.mxu0 %v711
      %769 = vmatmul.f32.gmra.mxu0 %v705
      %v770 = vpop.f32.mrf.mxu0
      %v771 = vadd.f32 0.0, %v770
      %772 = vdwg.mxu0
      %v773 = vadd.f32 %v684, %v731
      %v774 = vadd.f32 %v685, %v751
      %v775 = vadd.f32 %v686, %v771
      %s776 = scalar_lea.vmem %s2, 48
      %v777 = vld [vmem:[%s776] sm:$0xff]
      %778 = vst [vmem:[#allocation1] ss:$2 sm:$0xff] %v252
      %s779 = scalar_lea.vmem [#allocation1], 16
      %780 = vst [vmem:[%s779] ss:$2 sm:$0xff] %v253
      %v781 = vld.sshfl [vmem:[#allocation1] sm:$0xff pattern:$0x75316420]
      %v782 = vld.sshfl [vmem:[#allocation1 + $0x8] sm:$0xff pattern:$0x75316420]
      %v783 = vld.sshfl [vmem:[#allocation1 + $0x10] sm:$0xff pattern:$0x75316420]
      %784 = vrot.lane.b32.xlu0 %v781, 92
      %v785 = vpop.permute.xlu0 %784
      %786 = vrot.lane.b32.xlu0 %v782, 92
      %v787 = vpop.permute.xlu0 %786
      %788 = vrot.lane.b32.xlu0 %v783, 92
      %v789 = vpop.permute.xlu0 %788
      %vm790 = vcmask 752640
      %v791 = vsel %vm790, %v785, %v787
      %v792 = vsel %vm790, %v787, %v789
      %v794 = vsel %vm274, %v777, 0
      %v796 = vsel %vm278, %v791, 0
      %v798 = vsel %vm278, %v792, 0
      %v800 = vsel %vm278, %v789, 0
      %802 = vmatpush.msra.mxu0 0.0
      %803 = vmatpush.msra.mxu0 0.0
      %804 = vmatpush.msra.mxu0 0.0
      %805 = vmatpush.msra.mxu0 0.0
      %806 = vmatpush.msra.mxu0 0.0
      %807 = vmatpush.msra.mxu0 0.0
      %808 = vmatpush.msra.mxu0 0.0
      %809 = vmatpush.msra.mxu0 0.0
      %810 = vmatpush.msra.mxu0 0.0
      %811 = vmatpush.msra.mxu0 0.0
      %812 = vmatpush.msra.mxu0 0.0
      %813 = vmatpush.msra.mxu0 0.0
      %814 = vmatpush.msra.mxu0 0.0
      %815 = vmatpush.msra.mxu0 0.0
      %816 = vmatpush.msra.mxu0 0.0
      %817 = vmatpush.msra.mxu0 %v796
      %818 = vmatmul.f32.gmra.mxu0 %v794
      %v819 = vpop.f32.mrf.mxu0
      %v820 = vadd.f32 0.0, %v819
      %821 = vdwg.mxu0
      %822 = vmatpush.msra.mxu0 0.0
      %823 = vmatpush.msra.mxu0 0.0
      %824 = vmatpush.msra.mxu0 0.0
      %825 = vmatpush.msra.mxu0 0.0
      %826 = vmatpush.msra.mxu0 0.0
      %827 = vmatpush.msra.mxu0 0.0
      %828 = vmatpush.msra.mxu0 0.0
      %829 = vmatpush.msra.mxu0 0.0
      %830 = vmatpush.msra.mxu0 0.0
      %831 = vmatpush.msra.mxu0 0.0
      %832 = vmatpush.msra.mxu0 0.0
      %833 = vmatpush.msra.mxu0 0.0
      %834 = vmatpush.msra.mxu0 0.0
      %835 = vmatpush.msra.mxu0 0.0
      %836 = vmatpush.msra.mxu0 0.0
      %837 = vmatpush.msra.mxu0 %v798
      %838 = vmatmul.f32.gmra.mxu0 %v794
      %v839 = vpop.f32.mrf.mxu0
      %v840 = vadd.f32 0.0, %v839
      %841 = vdwg.mxu0
      %842 = vmatpush.msra.mxu0 0.0
      %843 = vmatpush.msra.mxu0 0.0
      %844 = vmatpush.msra.mxu0 0.0
      %845 = vmatpush.msra.mxu0 0.0
      %846 = vmatpush.msra.mxu0 0.0
      %847 = vmatpush.msra.mxu0 0.0
      %848 = vmatpush.msra.mxu0 0.0
      %849 = vmatpush.msra.mxu0 0.0
      %850 = vmatpush.msra.mxu0 0.0
      %851 = vmatpush.msra.mxu0 0.0
      %852 = vmatpush.msra.mxu0 0.0
      %853 = vmatpush.msra.mxu0 0.0
      %854 = vmatpush.msra.mxu0 0.0
      %855 = vmatpush.msra.mxu0 0.0
      %856 = vmatpush.msra.mxu0 0.0
      %857 = vmatpush.msra.mxu0 %v800
      %858 = vmatmul.f32.gmra.mxu0 %v794
      %v859 = vpop.f32.mrf.mxu0
      %v860 = vadd.f32 0.0, %v859
      %861 = vdwg.mxu0
      %v862 = vadd.f32 %v773, %v820
      %v863 = vadd.f32 %v774, %v840
      %v864 = vadd.f32 %v775, %v860
      %s865 = scalar_lea.vmem %s2, 56
      %v866 = vld [vmem:[%s865] sm:$0xff]
      %867 = vst [vmem:[#allocation1] ss:$2 sm:$0xff] %v252
      %s868 = scalar_lea.vmem [#allocation1], 16
      %869 = vst [vmem:[%s868] ss:$2 sm:$0xff] %v253
      %v870 = vld.sshfl [vmem:[#allocation1] sm:$0xff pattern:$0x75316420]
      %v871 = vld.sshfl [vmem:[#allocation1 + $0x8] sm:$0xff pattern:$0x75316420]
      %v872 = vld.sshfl [vmem:[#allocation1 + $0x10] sm:$0xff pattern:$0x75316420]
      %873 = vrot.lane.b32.xlu0 %v870, 91
      %v874 = vpop.permute.xlu0 %873
      %875 = vrot.lane.b32.xlu0 %v871, 91
      %v876 = vpop.permute.xlu0 %875
      %877 = vrot.lane.b32.xlu0 %v872, 91
      %v878 = vpop.permute.xlu0 %877
      %vm879 = vcmask 744448
      %v880 = vsel %vm879, %v874, %v876
      %v881 = vsel %vm879, %v876, %v878
      %v883 = vsel %vm274, %v866, 0
      %v885 = vsel %vm278, %v880, 0
      %v887 = vsel %vm278, %v881, 0
      %v889 = vsel %vm278, %v878, 0
      %891 = vmatpush.msra.mxu0 0.0
      %892 = vmatpush.msra.mxu0 0.0
      %893 = vmatpush.msra.mxu0 0.0
      %894 = vmatpush.msra.mxu0 0.0
      %895 = vmatpush.msra.mxu0 0.0
      %896 = vmatpush.msra.mxu0 0.0
      %897 = vmatpush.msra.mxu0 0.0
      %898 = vmatpush.msra.mxu0 0.0
      %899 = vmatpush.msra.mxu0 0.0
      %900 = vmatpush.msra.mxu0 0.0
      %901 = vmatpush.msra.mxu0 0.0
      %902 = vmatpush.msra.mxu0 0.0
      %903 = vmatpush.msra.mxu0 0.0
      %904 = vmatpush.msra.mxu0 0.0
      %905 = vmatpush.msra.mxu0 0.0
      %906 = vmatpush.msra.mxu0 %v885
      %907 = vmatmul.f32.gmra.mxu0 %v883
      %v908 = vpop.f32.mrf.mxu0
      %v909 = vadd.f32 0.0, %v908
      %910 = vdwg.mxu0
      %911 = vmatpush.msra.mxu0 0.0
      %912 = vmatpush.msra.mxu0 0.0
      %913 = vmatpush.msra.mxu0 0.0
      %914 = vmatpush.msra.mxu0 0.0
      %915 = vmatpush.msra.mxu0 0.0
      %916 = vmatpush.msra.mxu0 0.0
      %917 = vmatpush.msra.mxu0 0.0
      %918 = vmatpush.msra.mxu0 0.0
      %919 = vmatpush.msra.mxu0 0.0
      %920 = vmatpush.msra.mxu0 0.0
      %921 = vmatpush.msra.mxu0 0.0
      %922 = vmatpush.msra.mxu0 0.0
      %923 = vmatpush.msra.mxu0 0.0
      %924 = vmatpush.msra.mxu0 0.0
      %925 = vmatpush.msra.mxu0 0.0
      %926 = vmatpush.msra.mxu0 %v887
      %927 = vmatmul.f32.gmra.mxu0 %v883
      %v928 = vpop.f32.mrf.mxu0
      %v929 = vadd.f32 0.0, %v928
      %930 = vdwg.mxu0
      %931 = vmatpush.msra.mxu0 0.0
      %932 = vmatpush.msra.mxu0 0.0
      %933 = vmatpush.msra.mxu0 0.0
      %934 = vmatpush.msra.mxu0 0.0
      %935 = vmatpush.msra.mxu0 0.0
      %936 = vmatpush.msra.mxu0 0.0
      %937 = vmatpush.msra.mxu0 0.0
      %938 = vmatpush.msra.mxu0 0.0
      %939 = vmatpush.msra.mxu0 0.0
      %940 = vmatpush.msra.mxu0 0.0
      %941 = vmatpush.msra.mxu0 0.0
      %942 = vmatpush.msra.mxu0 0.0
      %943 = vmatpush.msra.mxu0 0.0
      %944 = vmatpush.msra.mxu0 0.0
      %945 = vmatpush.msra.mxu0 0.0
      %946 = vmatpush.msra.mxu0 %v889
      %947 = vmatmul.f32.gmra.mxu0 %v883
      %v948 = vpop.f32.mrf.mxu0
      %v949 = vadd.f32 0.0, %v948
      %950 = vdwg.mxu0
      %v951 = vadd.f32 %v862, %v909
      %v952 = vadd.f32 %v863, %v929
      %v953 = vadd.f32 %v864, %v949
      %s954 = scalar_lea.vmem %s2, 64
      %v955 = vld [vmem:[%s954] sm:$0xff]
      %956 = vst [vmem:[#allocation1] ss:$2 sm:$0xff] %v252
      %s957 = scalar_lea.vmem [#allocation1], 16
      %958 = vst [vmem:[%s957] ss:$2 sm:$0xff] %v253
      %v959 = vld.sshfl [vmem:[#allocation1] sm:$0xff pattern:$0x75316420]
      %v960 = vld.sshfl [vmem:[#allocation1 + $0x8] sm:$0xff pattern:$0x75316420]
      %v961 = vld.sshfl [vmem:[#allocation1 + $0x10] sm:$0xff pattern:$0x75316420]
      %962 = vrot.lane.b32.xlu0 %v959, 90
      %v963 = vpop.permute.xlu0 %962
      %964 = vrot.lane.b32.xlu0 %v960, 90
      %v965 = vpop.permute.xlu0 %964
      %966 = vrot.lane.b32.xlu0 %v961, 90
      %v967 = vpop.permute.xlu0 %966
      %vm968 = vcmask 736256
      %v969 = vsel %vm968, %v963, %v965
      %v970 = vsel %vm968, %v965, %v967
      %v972 = vsel %vm274, %v955, 0
      %v974 = vsel %vm278, %v969, 0
      %v976 = vsel %vm278, %v970, 0
      %v978 = vsel %vm278, %v967, 0
      %980 = vmatpush.msra.mxu0 0.0
      %981 = vmatpush.msra.mxu0 0.0
      %982 = vmatpush.msra.mxu0 0.0
      %983 = vmatpush.msra.mxu0 0.0
      %984 = vmatpush.msra.mxu0 0.0
      %985 = vmatpush.msra.mxu0 0.0
      %986 = vmatpush.msra.mxu0 0.0
      %987 = vmatpush.msra.mxu0 0.0
      %988 = vmatpush.msra.mxu0 0.0
      %989 = vmatpush.msra.mxu0 0.0
      %990 = vmatpush.msra.mxu0 0.0
      %991 = vmatpush.msra.mxu0 0.0
      %992 = vmatpush.msra.mxu0 0.0
      %993 = vmatpush.msra.mxu0 0.0
      %994 = vmatpush.msra.mxu0 0.0
      %995 = vmatpush.msra.mxu0 %v974
      %996 = vmatmul.f32.gmra.mxu0 %v972
      %v997 = vpop.f32.mrf.mxu0
      %v998 = vadd.f32 0.0, %v997
      %999 = vdwg.mxu0
      %1000 = vmatpush.msra.mxu0 0.0
      %1001 = vmatpush.msra.mxu0 0.0
      %1002 = vmatpush.msra.mxu0 0.0
      %1003 = vmatpush.msra.mxu0 0.0
      %1004 = vmatpush.msra.mxu0 0.0
      %1005 = vmatpush.msra.mxu0 0.0
      %1006 = vmatpush.msra.mxu0 0.0
      %1007 = vmatpush.msra.mxu0 0.0
      %1008 = vmatpush.msra.mxu0 0.0
      %1009 = vmatpush.msra.mxu0 0.0
      %1010 = vmatpush.msra.mxu0 0.0
      %1011 = vmatpush.msra.mxu0 0.0
      %1012 = vmatpush.msra.mxu0 0.0
      %1013 = vmatpush.msra.mxu0 0.0
      %1014 = vmatpush.msra.mxu0 0.0
      %1015 = vmatpush.msra.mxu0 %v976
      %1016 = vmatmul.f32.gmra.mxu0 %v972
      %v1017 = vpop.f32.mrf.mxu0
      %v1018 = vadd.f32 0.0, %v1017
      %1019 = vdwg.mxu0
      %1020 = vmatpush.msra.mxu0 0.0
      %1021 = vmatpush.msra.mxu0 0.0
      %1022 = vmatpush.msra.mxu0 0.0
      %1023 = vmatpush.msra.mxu0 0.0
      %1024 = vmatpush.msra.mxu0 0.0
      %1025 = vmatpush.msra.mxu0 0.0
      %1026 = vmatpush.msra.mxu0 0.0
      %1027 = vmatpush.msra.mxu0 0.0
      %1028 = vmatpush.msra.mxu0 0.0
      %1029 = vmatpush.msra.mxu0 0.0
      %1030 = vmatpush.msra.mxu0 0.0
      %1031 = vmatpush.msra.mxu0 0.0
      %1032 = vmatpush.msra.mxu0 0.0
      %1033 = vmatpush.msra.mxu0 0.0
      %1034 = vmatpush.msra.mxu0 0.0
      %1035 = vmatpush.msra.mxu0 %v978
      %1036 = vmatmul.f32.gmra.mxu0 %v972
      %v1037 = vpop.f32.mrf.mxu0
      %v1038 = vadd.f32 0.0, %v1037
      %1039 = vdwg.mxu0
      %v1040 = vadd.f32 %v951, %v998
      %v1041 = vadd.f32 %v952, %v1018
      %v1042 = vadd.f32 %v953, %v1038
      %v1043 = vld [vmem:[%s3] sm:$0xff]
      %1045 = vset.pattern.permute.xlu0 0
      %1046 = vperm.xlu0 %1045, %v1043
      %v1047 = vpop.permute.xlu0 %1046
      %v1049 = vadd.f32 %v1040, %v1047
      %v1050 = vadd.f32 %v1041, %v1047
      %v1051 = vadd.f32 %v1042, %v1047
      %v1052 = vmax.f32 %v1049, 0.0
      %v1053 = vmax.f32 %v1050, 0.0
      %v1054 = vmax.f32 %v1051, 0.0
      %v1055 = vld [vmem:[%s1] sm:$0x7]
      %v1057 = vperm.slane %v1055, 0
      %v1058 = vperm.slane %v1055, 1
      %v1059 = vperm.slane %v1055, 2
      %v1063 = vmul.f32 %v1052, %v1057
      %v1064 = vmul.f32 %v1053, %v1058
      %v1065 = vmul.f32 %v1054, %v1059
      %v1066 = vadd.f32 %v1063, %v1064
      %vm1067 = vcmask 556032
      %v1068 = vsel %vm1067, %v1065, 0.0
      %v1069 = vadd.f32 %v1066, %v1068
      %1070 = vadd.xlane.f32.xlu0 %v1069
      %v1071 = vpop.xlane.xlu0 %1070
      %v1072 = vmul.f32 %v1071, 0.00390625
      %v1073 = vld [vmem:[%s4] sm:$0xff]
      %v1074 = vld [vmem:[%s4 + $0x8] sm:$0xff]
      %v1075 = vld [vmem:[%s4 + $0x10] sm:$0xff]
      %v1076 = vld [vmem:[%s4 + $0x18] sm:$0xff]
      %v1077 = vld [vmem:[%s5] sm:$0xff]
      %v1078 = vld [vmem:[%s5 + $0x8] sm:$0xff]
      %v1079 = vld [vmem:[%s5 + $0x10] sm:$0xff]
      %v1080 = vld [vmem:[%s5 + $0x18] sm:$0xff]
      %vm1081 = vcmask 64512
      %v1083 = vsel %vm1081, %v1073, 0
      %v1086 = vsel %vm1081, %v1074, 0
      %v1089 = vsel %vm1081, %v1075, 0
      %v1092 = vsel %vm1081, %v1076, 0
      %1094 = vmatpush.msra.mxu0 0.0
      %1095 = vmatpush.msra.mxu0 0.0
      %1096 = vmatpush.msra.mxu0 0.0
      %1097 = vmatpush.msra.mxu0 0.0
      %1098 = vmatpush.msra.mxu0 0.0
      %1099 = vmatpush.msra.mxu0 0.0
      %1100 = vmatpush.msra.mxu0 0.0
      %1101 = vmatpush.msra.mxu0 0.0
      %1102 = vmatpush.msra.mxu0 0.0
      %1103 = vmatpush.msra.mxu0 0.0
      %1104 = vmatpush.msra.mxu0 0.0
      %1105 = vmatpush.msra.mxu0 0.0
      %1106 = vmatpush.msra.mxu0 0.0
      %1107 = vmatpush.msra.mxu0 0.0
      %1108 = vmatpush.msra.mxu0 0.0
      %1109 = vmatpush.msra.mxu0 %v1072
      %1110 = vmatmul.f32.gmra.mxu0 %v1083
      %v1111 = vpop.f32.mrf.mxu0
      %v1112 = vadd.f32 %v1077, %v1111
      %1113 = vmatmul.f32.gmra.mxu0 %v1086
      %v1114 = vpop.f32.mrf.mxu0
      %v1115 = vadd.f32 %v1078, %v1114
      %1116 = vmatmul.f32.gmra.mxu0 %v1089
      %v1117 = vpop.f32.mrf.mxu0
      %v1118 = vadd.f32 %v1079, %v1117
      %1119 = vmatmul.f32.gmra.mxu0 %v1092
      %v1120 = vpop.f32.mrf.mxu0
      %v1121 = vadd.f32 %v1080, %v1120
      %1122 = vdwg.mxu0
      %vm1123 = vcmask 7168
      %1124 = vst.msk [vmem:[%s251] sm:$0xff] %vm1123, %v1112
      %1125 = vst.msk [vmem:[%s251 + $0x8] sm:$0xff] %vm1123, %v1115
      %1126 = vst.msk [vmem:[%s251 + $0x10] sm:$0xff] %vm1123, %v1118
      %1127 = vst.msk [vmem:[%s251 + $0x18] sm:$0xff] %vm1123, %v1121
      %p1128 = scmp.lt.s32.totalorder %s17, 1
      %s1129 = scalar_select %p1128, %s17, 1
      %s1130 = smul.addr %s1129, 4
      %s1131 = smul.addr %s1130, 8
      %s1132 = scalar_lea.vmem %s6, %s1131
      // Predicated region
      $region45: #{my_model_forward.1} parent=43 // pred_check
        %p1133 = pneg %p166
      $region46: #{my_model_forward.1} parent=43 // pred_check_branch
        %1135 = sbr.rel (%p1133) target = $region48
      $region47: #{my_model_forward.1} parent=43 // pred_region
        _
      $region48: #{my_model_forward.1} parent=43 // pred_fallthru
        _
    $region44: #{my_model_forward.1} parent=5 // pred_fallthru
      _
    %p1136 = scmp.le.s32.totalorder 2, %s12
    // Predicated region
    $region49: #{my_model_forward.1} parent=5 // pred_check
      %p1137 = pneg %p1136
    $region50: #{my_model_forward.1} parent=5 // pred_check_branch
      %1139 = sbr.rel (%p1137) target = $region52
    $region51: #{my_model_forward.1} parent=5 // pred_region
      %s1140 = ssub.s32 %s12, 2
      // Predicated region
      $region53: #{my_model_forward.1} parent=51 // pred_check
        %p1141 = pneg %p172
      $region54: #{my_model_forward.1} parent=51 // pred_check_branch
        %1143 = sbr.rel (%p1141) target = $region56
      $region55: #{my_model_forward.1} parent=51 // pred_region
        %p1144 = scmp.lt.s32.totalorder %s18, 1
        %s1145 = scalar_select %p1144, %s18, 1
        %s1146 = smul.addr %s1145, 4
        %s1147 = smul.addr %s1146, 8
        %s1148 = scalar_lea.vmem %s6, %s1147
      $region56: #{my_model_forward.1} parent=51 // pred_fallthru
        _
    $region52: #{my_model_forward.1} parent=5 // pred_fallthru
      _
  $region6: #{my_model_forward.1} parent=0 // loop_footer
    %s16 = sadd.s32 1, %s12
  $region7: #{my_model_forward.1} parent=0 // loop_footer_branch
    %11 = sbr.rel target = $region3
  $region8: #{my_model_forward.1} parent=0 // loop_exit
    _

</llo_original>
